<compile_context>
chip_gen: v6e
topology: v6e:2x2x1
jax: 0.10.0
libtpu: 0.0.40
codegen_flags: <defaults>
</compile_context>

<pallas_src>
import functools

import jax
import jax.numpy as jnp
from jax.experimental import pallas as pl
from jax.experimental.pallas import tpu as pltpu


# ----------------------------------------------------------------------------
# Shared activation epilogue (f32 in, f32 out) — used by kernel and reference.
# ----------------------------------------------------------------------------
def _apply_act(y, act):
    if act is None:
        return y
    if act == "relu":
        return jnp.maximum(y, 0.0)
    if act == "tanh":
        return jnp.tanh(y)
    if act == "sigmoid":
        return jax.nn.sigmoid(y)  # stable; exp/recip land on the EUP slot
    raise ValueError(f"unknown activation {act!r}")


# ----------------------------------------------------------------------------
# Fused MLP kernel, batch on the lane axis.
#   refs = (xT_ref, w0, b0, w1, b1, ..., wL-1, bL-1, oT_ref)
#   xT_ref: (D0, TB)        input tile (batch on lanes)
#   w_i:    (D_out, D_in)   bf16, native nn.Linear layout, VMEM-resident
#   b_i:    (D_out, 1)      f32 column (broadcasts along the lane/batch axis)
#   oT_ref: (D_last, TB)    lane-dense output tile
# ----------------------------------------------------------------------------
def _fused_mlp_kernel(*refs, acts):
    xT_ref = refs[0]
    oT_ref = refs[-1]
    wb = refs[1:-1]

    n_layers = len(acts)
    h = xT_ref[...].astype(jnp.bfloat16)              # bf16 operand for the MXU
    for i, act in enumerate(acts):
        w_ref = wb[2 * i]
        b_ref = wb[2 * i + 1]
        # MXU: M = D_out (16..64), K = D_in (32..64), N = TB (batch fills lanes).
        y = jnp.dot(w_ref[...], h, preferred_element_type=jnp.float32)
        y = _apply_act(y + b_ref[...], act)           # f32 epilogue (v5e-safe)
        # Re-quantize to bf16 only when feeding the next MXU pass.
        h = y if i == n_layers - 1 else y.astype(jnp.bfloat16)
    oT_ref[...] = h.astype(oT_ref.dtype)              # lane-dense store (TB lanes)


# ----------------------------------------------------------------------------
# Tiling / VMEM helpers.
# ----------------------------------------------------------------------------
def _round_up(n, m):
    return ((n + m - 1) // m) * m


def _choose_batch_tile(B, max_tile=2048, align=256):
    """Batch tile on the lane axis.  >= 2 grid steps whenever B allows it (so
    the 'parallel' axis can shard across v7x's two TensorCores); tiles are
    256-aligned (multiple of MXU N on v6e/v7x and of the 128-lane vreg)."""
    if B <= align:
        return B                          # single full-batch tile (block == array dim)
    tb = _round_up(pl.cdiv(B, 2), align)  # at least two grid steps
    return min(tb, _round_up(max_tile, align))


def _vmem_limit_bytes(d0, out_dims, tb, params):
    """Per-step VMEM footprint estimate (+ headroom), clamped for v7x (64 MiB)."""
    f32 = 4
    x_tile = d0 * tb * f32                      # pipelined input tile
    o_tile = out_dims[-1] * tb * f32            # pipelined output tile
    wb = 0                                      # resident weights / biases
    for w, b in params:
        wb += w.size * w.dtype.itemsize
        wb += _round_up(b.shape[0], 8) * 128 * f32   # bias pads to (8,128) tiles
    inter = sum(d * tb for d in out_dims) * (f32 + 2)  # per-layer f32 + bf16 live copies
    est = 2 * (x_tile + o_tile) + 2 * wb + inter       # 2x = double buffering
    est = int(est * 1.5) + (4 << 20)                   # compiler scratch headroom
    return max(16 << 20, min(est, 48 << 20))           # ceiling safe for v7x VMEM


# ----------------------------------------------------------------------------
# Fused forward pass: one pallas_call for the whole MLP.
# ----------------------------------------------------------------------------
def nnet_forward(params, acts, x, *, max_row_tile=2048):
    """params: list of (w, b_col): w (D_out, D_in) bf16, b_col (D_out, 1) f32.
    acts: list of activation names (or None), one per layer.
    x: (B, D0) f32 (or bf16 to halve the input HBM stream).
    Returns (B, D_last) in x.dtype."""
    B, d0 = x.shape
    out_dims = [w.shape[0] for (w, _) in params]
    d_last = out_dims[-1]

    tb = _choose_batch_tile(B, max_row_tile)
    grid = (pl.cdiv(B, tb),)

    # Layout plumbing: put the batch on the last (lane) axis for the kernel.
    x_t = x.T                                          # (D0, B)
    flat_inputs = [x_t]
    for w, b_col in params:
        flat_inputs += [w, b_col]

    kernel = functools.partial(_fused_mlp_kernel, acts=tuple(acts))
    vmem_limit = _vmem_limit_bytes(d0, out_dims, tb, params)

    def build(single_buffer_weights):
        def resident(shape):
            # Grid-invariant block (constant index_map): never re-DMA'd, so the
            # default second pipeline buffer is pure VMEM waste.
            if single_buffer_weights:
                return pl.BlockSpec(shape, lambda i: (0, 0),
                                    pipeline_mode=pl.Buffered(1))
            return pl.BlockSpec(shape, lambda i: (0, 0))

        in_specs = [pl.BlockSpec((d0, tb), lambda i: (0, i))]
        for w, b_col in params:
            in_specs.append(resident(w.shape))
            in_specs.append(resident(b_col.shape))

        return pl.pallas_call(
            kernel,
            out_shape=jax.ShapeDtypeStruct((d_last, B), x.dtype),
            grid=grid,
            in_specs=in_specs,
            out_specs=pl.BlockSpec((d_last, tb), lambda i: (0, i)),
            compiler_params=pltpu.CompilerParams(
                dimension_semantics=("parallel",),     # batch axis -> 2 TCs on v7x
                vmem_limit_bytes=vmem_limit,
            ),
        )

    try:
        out_t = build(single_buffer_weights=True)(*flat_inputs)
    except Exception:
        # Pallas build without per-spec pipeline_mode support: fall back to the
        # default double buffering (weights are KB-scale, the waste is negligible).
        out_t = build(single_buffer_weights=False)(*flat_inputs)

    return out_t.T                                     # back to (B, D_last)


# ----------------------------------------------------------------------------
# Parameter init (xavier_uniform like the PyTorch module), packed once for the
# kernel: weight native (D_out, D_in) bf16, bias as a (D_out, 1) f32 column.
# ----------------------------------------------------------------------------
def init_nnet(key, input_dim, layers):
    """layers: list of `dim` (int) or `(dim, activation_name)` like the module."""
    params, acts = [], []
    d_in = input_dim
    for layer in layers:
        dim, act = (layer, None) if isinstance(layer, int) else layer
        key, kw, kb = jax.random.split(key, 3)
        bound_w = (6.0 / (d_in + dim)) ** 0.5          # xavier_uniform_
        w = jax.random.uniform(kw, (dim, d_in), jnp.float32, -bound_w, bound_w)
        bound_b = 1.0 / (d_in ** 0.5)                  # nn.Linear default bias
        b = jax.random.uniform(kb, (dim,), jnp.float32, -bound_b, bound_b)
        params.append((w.astype(jnp.bfloat16), b.reshape(dim, 1)))
        acts.append(act)
        d_in = dim
    return params, acts


# Pure-JAX reference mirroring the kernel's layout/quantization choices.
def nnet_forward_ref(params, acts, x):
    h = x.T.astype(jnp.bfloat16)
    n = len(acts)
    for i, ((w, b_col), act) in enumerate(zip(params, acts)):
        y = jnp.dot(w, h, preferred_element_type=jnp.float32) + b_col
        y = _apply_act(y, act)
        h = y if i == n - 1 else y.astype(jnp.bfloat16)
    return h.T.astype(x.dtype)


if __name__ == "__main__":
    key = jax.random.PRNGKey(0)
    key, kx1, kx2, kp = jax.random.split(key, 4)

    # NNet(input_dim=32, layers=[(64, relu), (64, tanh), 16])
    input_dim = 32
    layer_spec = [(64, "relu"), (64, "tanh"), 16]
    params, acts = init_nnet(kp, input_dim, layer_spec)

    # Small batch: single grid step (block == full batch).
    batch = 8
    x = jax.random.normal(kx1, (batch, input_dim), jnp.float32)
    out = jax.block_until_ready(nnet_forward(params, acts, x))
    ref = nnet_forward_ref(params, acts, x)
    assert out.shape == (batch, 16)
    # Tolerance absorbs bf16 requantization / transcendental rounding noise
    # (kernel and reference use the same bf16/f32 scheme; real bugs are O(1)).
    assert jnp.allclose(out, ref, atol=2e-3, rtol=1e-3), "mismatch (batch=8)"

    # Larger batch: exercises the tiled path (grid=(2,), partial last block).
    batch2 = 384
    x2 = jax.random.normal(kx2, (batch2, input_dim), jnp.float32)
    out2 = jax.block_until_ready(nnet_forward(params, acts, x2))
    ref2 = nnet_forward_ref(params, acts, x2)
    assert out2.shape == (batch2, 16)
    assert jnp.allclose(out2, ref2, atol=2e-3, rtol=1e-3), "mismatch (batch=384)"

    print("KERNEL_OK")
</pallas_src>

<mosaic_0001>
module attributes {stable_mosaic.version = 11 : i64} {
  func.func @_fused_mlp_kernel(%arg0: i32, %arg1: memref<32x8xf32, #tpu.memory_space<vmem>>, %arg2: memref<64x32xbf16, #tpu.memory_space<vmem>>, %arg3: memref<64x1xf32, #tpu.memory_space<vmem>>, %arg4: memref<64x64xbf16, #tpu.memory_space<vmem>>, %arg5: memref<64x1xf32, #tpu.memory_space<vmem>>, %arg6: memref<16x64xbf16, #tpu.memory_space<vmem>>, %arg7: memref<16x1xf32, #tpu.memory_space<vmem>>, %arg8: memref<16x8xf32, #tpu.memory_space<vmem>>) attributes {dimension_semantics = [#tpu.dimension_semantics<parallel>], iteration_bounds = array<i64: 1>, scalar_prefetch = 0 : i64, scratch_operands = 0 : i64, tpu.core_type = #tpu.core_type<tc>, window_params = [{transform_indices = @transform_0, window_bounds = array<i64: 32, 8>}, {pipeline_mode = #tpu.pipeline_mode<synchronous>, transform_indices = @transform_1, window_bounds = array<i64: 64, 32>}, {pipeline_mode = #tpu.pipeline_mode<synchronous>, transform_indices = @transform_2, window_bounds = array<i64: 64, 1>}, {pipeline_mode = #tpu.pipeline_mode<synchronous>, transform_indices = @transform_3, window_bounds = array<i64: 64, 64>}, {pipeline_mode = #tpu.pipeline_mode<synchronous>, transform_indices = @transform_4, window_bounds = array<i64: 64, 1>}, {pipeline_mode = #tpu.pipeline_mode<synchronous>, transform_indices = @transform_5, window_bounds = array<i64: 16, 64>}, {pipeline_mode = #tpu.pipeline_mode<synchronous>, transform_indices = @transform_6, window_bounds = array<i64: 16, 1>}, {transform_indices = @transform_7, window_bounds = array<i64: 16, 8>}]} {
    %c0 = arith.constant 0 : index
    %c0_0 = arith.constant 0 : index
    %0 = vector.load %arg1[%c0, %c0_0] : memref<32x8xf32, #tpu.memory_space<vmem>>, vector<32x8xf32>
    %1 = arith.truncf %0 : vector<32x8xf32> to vector<32x8xbf16>
    %c0_1 = arith.constant 0 : index
    %c0_2 = arith.constant 0 : index
    %2 = vector.load %arg2[%c0_1, %c0_2] : memref<64x32xbf16, #tpu.memory_space<vmem>>, vector<64x32xbf16>
    %cst = arith.constant dense<0.000000e+00> : vector<64x8xf32>
    %3 = tpu.matmul %2, %1, %cst {dimension_numbers = #tpu.dot_dimension_numbers<[1], [0], [0], [1], [0, 0, 1, 1], [], []>} : vector<64x32xbf16>, vector<32x8xbf16>, vector<64x8xf32> -> vector<64x8xf32>
    %c0_3 = arith.constant 0 : index
    %c0_4 = arith.constant 0 : index
    %4 = vector.load %arg3[%c0_3, %c0_4] : memref<64x1xf32, #tpu.memory_space<vmem>>, vector<64x1xf32>
    %5 = vector.broadcast %4 : vector<64x1xf32> to vector<64x8xf32>
    %6 = arith.addf %3, %5 : vector<64x8xf32>
    %cst_5 = arith.constant 0.000000e+00 : f32
    %7 = vector.broadcast %cst_5 : f32 to vector<64x8xf32>
    %8 = arith.maximumf %6, %7 : vector<64x8xf32>
    %9 = arith.truncf %8 : vector<64x8xf32> to vector<64x8xbf16>
    %c0_6 = arith.constant 0 : index
    %c0_7 = arith.constant 0 : index
    %10 = vector.load %arg4[%c0_6, %c0_7] : memref<64x64xbf16, #tpu.memory_space<vmem>>, vector<64x64xbf16>
    %cst_8 = arith.constant dense<0.000000e+00> : vector<64x8xf32>
    %11 = tpu.matmul %10, %9, %cst_8 {dimension_numbers = #tpu.dot_dimension_numbers<[1], [0], [0], [1], [0, 0, 1, 1], [], []>} : vector<64x64xbf16>, vector<64x8xbf16>, vector<64x8xf32> -> vector<64x8xf32>
    %c0_9 = arith.constant 0 : index
    %c0_10 = arith.constant 0 : index
    %12 = vector.load %arg5[%c0_9, %c0_10] : memref<64x1xf32, #tpu.memory_space<vmem>>, vector<64x1xf32>
    %13 = vector.broadcast %12 : vector<64x1xf32> to vector<64x8xf32>
    %14 = arith.addf %11, %13 : vector<64x8xf32>
    %15 = math.tanh %14 : vector<64x8xf32>
    %16 = arith.truncf %15 : vector<64x8xf32> to vector<64x8xbf16>
    %c0_11 = arith.constant 0 : index
    %c0_12 = arith.constant 0 : index
    %17 = vector.load %arg6[%c0_11, %c0_12] : memref<16x64xbf16, #tpu.memory_space<vmem>>, vector<16x64xbf16>
    %cst_13 = arith.constant dense<0.000000e+00> : vector<16x8xf32>
    %18 = tpu.matmul %17, %16, %cst_13 {dimension_numbers = #tpu.dot_dimension_numbers<[1], [0], [0], [1], [0, 0, 1, 1], [], []>} : vector<16x64xbf16>, vector<64x8xbf16>, vector<16x8xf32> -> vector<16x8xf32>
    %c0_14 = arith.constant 0 : index
    %c0_15 = arith.constant 0 : index
    %19 = vector.load %arg7[%c0_14, %c0_15] : memref<16x1xf32, #tpu.memory_space<vmem>>, vector<16x1xf32>
    %20 = vector.broadcast %19 : vector<16x1xf32> to vector<16x8xf32>
    %21 = arith.addf %18, %20 : vector<16x8xf32>
    %c0_16 = arith.constant 0 : index
    %c0_17 = arith.constant 0 : index
    %22 = vector.load %arg8[%c0_16, %c0_17] : memref<16x8xf32, #tpu.memory_space<vmem>>, vector<16x8xf32>
    tpu.vector_store %arg8[%c0_16, %c0_17], %21 {strides = array<i32>} : memref<16x8xf32, #tpu.memory_space<vmem>>, vector<16x8xf32>,
    return
  }
  func.func @transform_0(%arg0: i32) -> (i32, i32) {
    %c0_i32 = arith.constant 0 : i32
    %c0_i32_0 = arith.constant 0 : i32
    return %c0_i32, %arg0 : i32, i32
  }
  func.func @transform_1(%arg0: i32) -> (i32, i32) {
    %c0_i32 = arith.constant 0 : i32
    %c0_i32_0 = arith.constant 0 : i32
    %c0_i32_1 = arith.constant 0 : i32
    return %c0_i32, %c0_i32_0 : i32, i32
  }
  func.func @transform_2(%arg0: i32) -> (i32, i32) {
    %c0_i32 = arith.constant 0 : i32
    %c0_i32_0 = arith.constant 0 : i32
    %c0_i32_1 = arith.constant 0 : i32
    return %c0_i32, %c0_i32_0 : i32, i32
  }
  func.func @transform_3(%arg0: i32) -> (i32, i32) {
    %c0_i32 = arith.constant 0 : i32
    %c0_i32_0 = arith.constant 0 : i32
    %c0_i32_1 = arith.constant 0 : i32
    return %c0_i32, %c0_i32_0 : i32, i32
  }
  func.func @transform_4(%arg0: i32) -> (i32, i32) {
    %c0_i32 = arith.constant 0 : i32
    %c0_i32_0 = arith.constant 0 : i32
    %c0_i32_1 = arith.constant 0 : i32
    return %c0_i32, %c0_i32_0 : i32, i32
  }
  func.func @transform_5(%arg0: i32) -> (i32, i32) {
    %c0_i32 = arith.constant 0 : i32
    %c0_i32_0 = arith.constant 0 : i32
    %c0_i32_1 = arith.constant 0 : i32
    return %c0_i32, %c0_i32_0 : i32, i32
  }
  func.func @transform_6(%arg0: i32) -> (i32, i32) {
    %c0_i32 = arith.constant 0 : i32
    %c0_i32_0 = arith.constant 0 : i32
    %c0_i32_1 = arith.constant 0 : i32
    return %c0_i32, %c0_i32_0 : i32, i32
  }
  func.func @transform_7(%arg0: i32) -> (i32, i32) {
    %c0_i32 = arith.constant 0 : i32
    %c0_i32_0 = arith.constant 0 : i32
    return %c0_i32, %arg0 : i32, i32
  }
}

module attributes {stable_mosaic.version = 11 : i64} {
  func.func @_fused_mlp_kernel(%arg0: i32, %arg1: memref<32x8xf32, #tpu.memory_space<vmem>>, %arg2: memref<64x32xbf16, #tpu.memory_space<vmem>>, %arg3: memref<64x1xf32, #tpu.memory_space<vmem>>, %arg4: memref<64x64xbf16, #tpu.memory_space<vmem>>, %arg5: memref<64x1xf32, #tpu.memory_space<vmem>>, %arg6: memref<16x64xbf16, #tpu.memory_space<vmem>>, %arg7: memref<16x1xf32, #tpu.memory_space<vmem>>, %arg8: memref<16x8xf32, #tpu.memory_space<vmem>>) attributes {dimension_semantics = [#tpu.dimension_semantics<parallel>], iteration_bounds = array<i64: 1>, scalar_prefetch = 0 : i64, scratch_operands = 0 : i64, tpu.core_type = #tpu.core_type<tc>, window_params = [{transform_indices = @transform_0, window_bounds = array<i64: 32, 8>}, {pipeline_mode = #tpu.pipeline_mode<synchronous>, transform_indices = @transform_1, window_bounds = array<i64: 64, 32>}, {pipeline_mode = #tpu.pipeline_mode<synchronous>, transform_indices = @transform_2, window_bounds = array<i64: 64, 1>}, {pipeline_mode = #tpu.pipeline_mode<synchronous>, transform_indices = @transform_3, window_bounds = array<i64: 64, 64>}, {pipeline_mode = #tpu.pipeline_mode<synchronous>, transform_indices = @transform_4, window_bounds = array<i64: 64, 1>}, {pipeline_mode = #tpu.pipeline_mode<synchronous>, transform_indices = @transform_5, window_bounds = array<i64: 16, 64>}, {pipeline_mode = #tpu.pipeline_mode<synchronous>, transform_indices = @transform_6, window_bounds = array<i64: 16, 1>}, {transform_indices = @transform_7, window_bounds = array<i64: 16, 8>}]} {
    %c0 = arith.constant 0 : index
    %c0_0 = arith.constant 0 : index
    %0 = vector.load %arg1[%c0, %c0_0] : memref<32x8xf32, #tpu.memory_space<vmem>>, vector<32x8xf32>
    %1 = arith.truncf %0 : vector<32x8xf32> to vector<32x8xbf16>
    %c0_1 = arith.constant 0 : index
    %c0_2 = arith.constant 0 : index
    %2 = vector.load %arg2[%c0_1, %c0_2] : memref<64x32xbf16, #tpu.memory_space<vmem>>, vector<64x32xbf16>
    %cst = arith.constant dense<0.000000e+00> : vector<64x8xf32>
    %3 = tpu.matmul %2, %1, %cst {dimension_numbers = #tpu.dot_dimension_numbers<[1], [0], [0], [1], [0, 0, 1, 1], [], []>} : vector<64x32xbf16>, vector<32x8xbf16>, vector<64x8xf32> -> vector<64x8xf32>
    %c0_3 = arith.constant 0 : index
    %c0_4 = arith.constant 0 : index
    %4 = vector.load %arg3[%c0_3, %c0_4] : memref<64x1xf32, #tpu.memory_space<vmem>>, vector<64x1xf32>
    %5 = vector.broadcast %4 : vector<64x1xf32> to vector<64x8xf32>
    %6 = arith.addf %3, %5 : vector<64x8xf32>
    %cst_5 = arith.constant 0.000000e+00 : f32
    %7 = vector.broadcast %cst_5 : f32 to vector<64x8xf32>
    %8 = arith.maximumf %6, %7 : vector<64x8xf32>
    %9 = arith.truncf %8 : vector<64x8xf32> to vector<64x8xbf16>
    %c0_6 = arith.constant 0 : index
    %c0_7 = arith.constant 0 : index
    %10 = vector.load %arg4[%c0_6, %c0_7] : memref<64x64xbf16, #tpu.memory_space<vmem>>, vector<64x64xbf16>
    %cst_8 = arith.constant dense<0.000000e+00> : vector<64x8xf32>
    %11 = tpu.matmul %10, %9, %cst_8 {dimension_numbers = #tpu.dot_dimension_numbers<[1], [0], [0], [1], [0, 0, 1, 1], [], []>} : vector<64x64xbf16>, vector<64x8xbf16>, vector<64x8xf32> -> vector<64x8xf32>
    %c0_9 = arith.constant 0 : index
    %c0_10 = arith.constant 0 : index
    %12 = vector.load %arg5[%c0_9, %c0_10] : memref<64x1xf32, #tpu.memory_space<vmem>>, vector<64x1xf32>
    %13 = vector.broadcast %12 : vector<64x1xf32> to vector<64x8xf32>
    %14 = arith.addf %11, %13 : vector<64x8xf32>
    %15 = math.tanh %14 : vector<64x8xf32>
    %16 = arith.truncf %15 : vector<64x8xf32> to vector<64x8xbf16>
    %c0_11 = arith.constant 0 : index
    %c0_12 = arith.constant 0 : index
    %17 = vector.load %arg6[%c0_11, %c0_12] : memref<16x64xbf16, #tpu.memory_space<vmem>>, vector<16x64xbf16>
    %cst_13 = arith.constant dense<0.000000e+00> : vector<16x8xf32>
    %18 = tpu.matmul %17, %16, %cst_13 {dimension_numbers = #tpu.dot_dimension_numbers<[1], [0], [0], [1], [0, 0, 1, 1], [], []>} : vector<16x64xbf16>, vector<64x8xbf16>, vector<16x8xf32> -> vector<16x8xf32>
    %c0_14 = arith.constant 0 : index
    %c0_15 = arith.constant 0 : index
    %19 = vector.load %arg7[%c0_14, %c0_15] : memref<16x1xf32, #tpu.memory_space<vmem>>, vector<16x1xf32>
    %20 = vector.broadcast %19 : vector<16x1xf32> to vector<16x8xf32>
    %21 = arith.addf %18, %20 : vector<16x8xf32>
    %c0_16 = arith.constant 0 : index
    %c0_17 = arith.constant 0 : index
    %22 = vector.load %arg8[%c0_16, %c0_17] : memref<16x8xf32, #tpu.memory_space<vmem>>, vector<16x8xf32>
    tpu.vector_store %arg8[%c0_16, %c0_17], %21 {strides = array<i32>} : memref<16x8xf32, #tpu.memory_space<vmem>>, vector<16x8xf32>,
    return
  }
  func.func @transform_0(%arg0: i32) -> (i32, i32) {
    %c0_i32 = arith.constant 0 : i32
    %c0_i32_0 = arith.constant 0 : i32
    return %c0_i32, %arg0 : i32, i32
  }
  func.func @transform_1(%arg0: i32) -> (i32, i32) {
    %c0_i32 = arith.constant 0 : i32
    %c0_i32_0 = arith.constant 0 : i32
    %c0_i32_1 = arith.constant 0 : i32
    return %c0_i32, %c0_i32_0 : i32, i32
  }
  func.func @transform_2(%arg0: i32) -> (i32, i32) {
    %c0_i32 = arith.constant 0 : i32
    %c0_i32_0 = arith.constant 0 : i32
    %c0_i32_1 = arith.constant 0 : i32
    return %c0_i32, %c0_i32_0 : i32, i32
  }
  func.func @transform_3(%arg0: i32) -> (i32, i32) {
    %c0_i32 = arith.constant 0 : i32
    %c0_i32_0 = arith.constant 0 : i32
    %c0_i32_1 = arith.constant 0 : i32
    return %c0_i32, %c0_i32_0 : i32, i32
  }
  func.func @transform_4(%arg0: i32) -> (i32, i32) {
    %c0_i32 = arith.constant 0 : i32
    %c0_i32_0 = arith.constant 0 : i32
    %c0_i32_1 = arith.constant 0 : i32
    return %c0_i32, %c0_i32_0 : i32, i32
  }
  func.func @transform_5(%arg0: i32) -> (i32, i32) {
    %c0_i32 = arith.constant 0 : i32
    %c0_i32_0 = arith.constant 0 : i32
    %c0_i32_1 = arith.constant 0 : i32
    return %c0_i32, %c0_i32_0 : i32, i32
  }
  func.func @transform_6(%arg0: i32) -> (i32, i32) {
    %c0_i32 = arith.constant 0 : i32
    %c0_i32_0 = arith.constant 0 : i32
    %c0_i32_1 = arith.constant 0 : i32
    return %c0_i32, %c0_i32_0 : i32, i32
  }
  func.func @transform_7(%arg0: i32) -> (i32, i32) {
    %c0_i32 = arith.constant 0 : i32
    %c0_i32_0 = arith.constant 0 : i32
    return %c0_i32, %arg0 : i32, i32
  }
}

</mosaic_0001>

<llo_original>
// kernel: tpu_custom_call.1
$region0: #{tpu_custom_call.1}
  #allocation0 [shape = 'u32[]', space=smem, size = 0x4, offset = 0x4, fixed_abs, tag = 'smem constant byte address 0x4 - core index']
  #allocation1 [shape = 'u32[144,128]{1,0:T(1,128)}', space=vmem, size = 0x12000, scoped, tag = 'internal scratch']
  %s0 = inlined_call_operand.vmem [shape: f32[32,8], index: 0, kind: input, shape index: {}]
  %s1 = inlined_call_operand.vmem [shape: bf16[64,32], index: 1, kind: input, shape index: {}]
  %s2 = inlined_call_operand.vmem [shape: f32[64,1], index: 2, kind: input, shape index: {}]
  %s3 = inlined_call_operand.vmem [shape: bf16[64,64], index: 3, kind: input, shape index: {}]
  %s4 = inlined_call_operand.vmem [shape: f32[64,1], index: 4, kind: input, shape index: {}]
  %s5 = inlined_call_operand.vmem [shape: bf16[16,64], index: 5, kind: input, shape index: {}]
  %s6 = inlined_call_operand.vmem [shape: f32[16,1], index: 6, kind: input, shape index: {}]
  %s7 = inlined_call_operand.vmem [shape: f32[16,8], index: 7, kind: output, shape index: {}]
  %s8 = sld [smem:[#allocation0]]
  $region38: #{tpu_custom_call.1} parent=0
    _
  %s10 = ssub.s32 1, %s8
  %s11 = scalar_select 0, %s10, %s8
  // Predicated region
  $region2: #{tpu_custom_call.1} parent=0 // pred_check
    _
  $region3: #{tpu_custom_call.1} parent=0 // pred_check_branch
    %13 = sbr.rel (0) target = $region5
  $region4: #{tpu_custom_call.1} parent=0 // pred_region
    _
  $region5: #{tpu_custom_call.1} parent=0 // pred_fallthru
    _
  // Predicated region
  $region6: #{tpu_custom_call.1} parent=0 // pred_check
    _
  $region7: #{tpu_custom_call.1} parent=0 // pred_check_branch
    %15 = sbr.rel (0) target = $region9
  $region8: #{tpu_custom_call.1} parent=0 // pred_region
    _
  $region9: #{tpu_custom_call.1} parent=0 // pred_fallthru
    _
  // Predicated region
  $region10: #{tpu_custom_call.1} parent=0 // pred_check
    _
  $region11: #{tpu_custom_call.1} parent=0 // pred_check_branch
    %17 = sbr.rel (0) target = $region13
  $region12: #{tpu_custom_call.1} parent=0 // pred_region
    _
  $region13: #{tpu_custom_call.1} parent=0 // pred_fallthru
    _
  // Predicated region
  $region14: #{tpu_custom_call.1} parent=0 // pred_check
    _
  $region15: #{tpu_custom_call.1} parent=0 // pred_check_branch
    %19 = sbr.rel (0) target = $region17
  $region16: #{tpu_custom_call.1} parent=0 // pred_region
    _
  $region17: #{tpu_custom_call.1} parent=0 // pred_fallthru
    _
  // Predicated region
  $region18: #{tpu_custom_call.1} parent=0 // pred_check
    _
  $region19: #{tpu_custom_call.1} parent=0 // pred_check_branch
    %21 = sbr.rel (0) target = $region21
  $region20: #{tpu_custom_call.1} parent=0 // pred_region
    _
  $region21: #{tpu_custom_call.1} parent=0 // pred_fallthru
    _
  // Predicated region
  $region22: #{tpu_custom_call.1} parent=0 // pred_check
    _
  $region23: #{tpu_custom_call.1} parent=0 // pred_check_branch
    %23 = sbr.rel (0) target = $region25
  $region24: #{tpu_custom_call.1} parent=0 // pred_region
    _
  $region25: #{tpu_custom_call.1} parent=0 // pred_fallthru
    _
  // Predicated region
  $region26: #{tpu_custom_call.1} parent=0 // pred_check
    _
  $region27: #{tpu_custom_call.1} parent=0 // pred_check_branch
    %25 = sbr.rel (0) target = $region29
  $region28: #{tpu_custom_call.1} parent=0 // pred_region
    _
  $region29: #{tpu_custom_call.1} parent=0 // pred_fallthru
    _
  %v27 = vld [vmem:[%s0] sm:$0xff]
  %v28 = vld [vmem:[%s0 + $0x8] sm:$0xff]
  %v29 = vld [vmem:[%s0 + $0x10] sm:$0xff]
  %v30 = vld [vmem:[%s0 + $0x18] sm:$0xff]
  %v31 = vpack.c.bf16 %v28, %v27
  %v32 = vpack.c.bf16 %v30, %v29
  %v33 = vld [vmem:[%s1] sm:$0xf]
  %v34 = vld [vmem:[%s1 + $0x4] sm:$0xf]
  %v35 = vld [vmem:[%s1 + $0x8] sm:$0xf]
  %v36 = vld [vmem:[%s1 + $0xc] sm:$0xf]
  %v37 = vld [vmem:[%s1 + $0x10] sm:$0xf]
  %v38 = vld [vmem:[%s1 + $0x14] sm:$0xf]
  %v39 = vld [vmem:[%s1 + $0x18] sm:$0xf]
  %v40 = vld [vmem:[%s1 + $0x1c] sm:$0xf]
  %v41 = vld [vmem:[%s2] sm:$0xff]
  %v42 = vld [vmem:[%s2 + $0x8] sm:$0xff]
  %v43 = vld [vmem:[%s2 + $0x10] sm:$0xff]
  %v44 = vld [vmem:[%s2 + $0x18] sm:$0xff]
  %v45 = vld [vmem:[%s2 + $0x20] sm:$0xff]
  %v46 = vld [vmem:[%s2 + $0x28] sm:$0xff]
  %v47 = vld [vmem:[%s2 + $0x30] sm:$0xff]
  %v48 = vld [vmem:[%s2 + $0x38] sm:$0xff]
  %50 = vset.pattern.permute.xlu0 0
  %51 = vperm.xlu0 %50, %v41
  %v52 = vpop.permute.xlu0 %51
  %55 = vset.pattern.permute.xlu0 0
  %56 = vperm.xlu0 %55, %v42
  %v57 = vpop.permute.xlu0 %56
  %60 = vset.pattern.permute.xlu0 0
  %61 = vperm.xlu0 %60, %v43
  %v62 = vpop.permute.xlu0 %61
  %65 = vset.pattern.permute.xlu0 0
  %66 = vperm.xlu0 %65, %v44
  %v67 = vpop.permute.xlu0 %66
  %70 = vset.pattern.permute.xlu0 0
  %71 = vperm.xlu0 %70, %v45
  %v72 = vpop.permute.xlu0 %71
  %75 = vset.pattern.permute.xlu0 0
  %76 = vperm.xlu0 %75, %v46
  %v77 = vpop.permute.xlu0 %76
  %80 = vset.pattern.permute.xlu0 0
  %81 = vperm.xlu0 %80, %v47
  %v82 = vpop.permute.xlu0 %81
  %85 = vset.pattern.permute.xlu0 0
  %86 = vperm.xlu0 %85, %v48
  %v87 = vpop.permute.xlu0 %86
  %v97 = vunpack.c.l.b16 %v33
  %v98 = vunpack.c.l.b16 %v34
  %v99 = vunpack.c.l.b16 %v35
  %v100 = vunpack.c.l.b16 %v36
  %v101 = vunpack.c.l.b16 %v37
  %v102 = vunpack.c.l.b16 %v38
  %v103 = vunpack.c.l.b16 %v39
  %v104 = vunpack.c.l.b16 %v40
  %v105 = vpack.c.b16 %v98, %v97
  %v106 = vpack.c.b16 %v100, %v99
  %v107 = vpack.c.b16 %v102, %v101
  %v108 = vpack.c.b16 %v104, %v103
  %vm109 = vcmask 261120
  %v111 = vsel %vm109, %v105, 0
  %v114 = vsel %vm109, %v106, 0
  %v117 = vsel %vm109, %v107, 0
  %v120 = vsel %vm109, %v108, 0
  %122 = vmatprep.subr.bf16.mxu0 0
  %123 = vmatpush1.bf16.msra.mxu0 0
  %124 = vmatprep.subr.bf16.mxu0 0
  %125 = vmatpush1.bf16.msra.mxu0 0
  %126 = vmatprep.subr.bf16.mxu0 0
  %127 = vmatpush1.bf16.msra.mxu0 0
  %128 = vmatprep.subr.bf16.mxu0 0
  %129 = vmatpush1.bf16.msra.mxu0 0
  %130 = vmatprep.subr.bf16.mxu0 0
  %131 = vmatpush1.bf16.msra.mxu0 0
  %132 = vmatprep.subr.bf16.mxu0 0
  %133 = vmatpush1.bf16.msra.mxu0 0
  %134 = vmatprep.subr.bf16.mxu0 0
  %135 = vmatpush1.bf16.msra.mxu0 %v32
  %136 = vmatprep.subr.bf16.mxu0 0
  %137 = vmatpush1.bf16.msra.mxu0 %v31
  %138 = vmatprep.subr.bf16.mxu0 0
  %139 = vmatpush2.bf16.msra.mxu0 0
  %140 = vmatprep.subr.bf16.mxu0 0
  %141 = vmatpush2.bf16.msra.mxu0 0
  %142 = vmatprep.subr.bf16.mxu0 0
  %143 = vmatpush2.bf16.msra.mxu0 0
  %144 = vmatprep.subr.bf16.mxu0 0
  %145 = vmatpush2.bf16.msra.mxu0 0
  %146 = vmatprep.subr.bf16.mxu0 0
  %147 = vmatpush2.bf16.msra.mxu0 0
  %148 = vmatprep.subr.bf16.mxu0 0
  %149 = vmatpush2.bf16.msra.mxu0 0
  %150 = vmatprep.subr.bf16.mxu0 0
  %151 = vmatpush2.bf16.msra.mxu0 0
  %152 = vmatprep.subr.bf16.mxu0 0
  %153 = vmatpush2.bf16.msra.mxu0 0
  %154 = vmatprep.mubr.bf16.mxu0 0
  %155 = vmatmul.mubr.bf16.gmra.mxu0 %v111
  %v156 = vpop.f32.mrf.mxu0
  %v157 = vadd.f32 %v52, %v156
  %v158 = vpop.f32.mrf.mxu0
  %v159 = vpop.f32.mrf.mxu0
  %v160 = vadd.f32 %v57, %v159
  %v161 = vpop.f32.mrf.mxu0
  %162 = vmatprep.mubr.bf16.mxu0 0
  %163 = vmatmul.mubr.bf16.gmra.mxu0 %v114
  %v164 = vpop.f32.mrf.mxu0
  %v165 = vadd.f32 %v62, %v164
  %v166 = vpop.f32.mrf.mxu0
  %v167 = vpop.f32.mrf.mxu0
  %v168 = vadd.f32 %v67, %v167
  %v169 = vpop.f32.mrf.mxu0
  %170 = vmatprep.mubr.bf16.mxu0 0
  %171 = vmatmul.mubr.bf16.gmra.mxu0 %v117
  %v172 = vpop.f32.mrf.mxu0
  %v173 = vadd.f32 %v72, %v172
  %v174 = vpop.f32.mrf.mxu0
  %v175 = vpop.f32.mrf.mxu0
  %v176 = vadd.f32 %v77, %v175
  %v177 = vpop.f32.mrf.mxu0
  %178 = vmatprep.mubr.bf16.mxu0 0
  %179 = vmatmul.mubr.bf16.gmra.mxu0 %v120
  %v180 = vpop.f32.mrf.mxu0
  %v181 = vadd.f32 %v82, %v180
  %v182 = vpop.f32.mrf.mxu0
  %v183 = vpop.f32.mrf.mxu0
  %v184 = vadd.f32 %v87, %v183
  %v185 = vpop.f32.mrf.mxu0
  %186 = vdwg.mxu0
  %v187 = vmax.f32 %v157, 0.0
  %v188 = vmax.f32 %v160, 0.0
  %v189 = vmax.f32 %v165, 0.0
  %v190 = vmax.f32 %v168, 0.0
  %v191 = vmax.f32 %v173, 0.0
  %v192 = vmax.f32 %v176, 0.0
  %v193 = vmax.f32 %v181, 0.0
  %v194 = vmax.f32 %v184, 0.0
  %v195 = vpack.c.bf16 %v188, %v187
  %v196 = vpack.c.bf16 %v190, %v189
  %v197 = vpack.c.bf16 %v192, %v191
  %v198 = vpack.c.bf16 %v194, %v193
  %v199 = vld [vmem:[%s3] sm:$0xf]
  %v200 = vld [vmem:[%s3 + $0x4] sm:$0xf]
  %v201 = vld [vmem:[%s3 + $0x8] sm:$0xf]
  %v202 = vld [vmem:[%s3 + $0xc] sm:$0xf]
  %v203 = vld [vmem:[%s3 + $0x10] sm:$0xf]
  %v204 = vld [vmem:[%s3 + $0x14] sm:$0xf]
  %v205 = vld [vmem:[%s3 + $0x18] sm:$0xf]
  %v206 = vld [vmem:[%s3 + $0x1c] sm:$0xf]
  %v207 = vld [vmem:[%s4] sm:$0xff]
  %v208 = vld [vmem:[%s4 + $0x8] sm:$0xff]
  %v209 = vld [vmem:[%s4 + $0x10] sm:$0xff]
  %v210 = vld [vmem:[%s4 + $0x18] sm:$0xff]
  %v211 = vld [vmem:[%s4 + $0x20] sm:$0xff]
  %v212 = vld [vmem:[%s4 + $0x28] sm:$0xff]
  %v213 = vld [vmem:[%s4 + $0x30] sm:$0xff]
  %v214 = vld [vmem:[%s4 + $0x38] sm:$0xff]
  %216 = vset.pattern.permute.xlu0 0
  %217 = vperm.xlu0 %216, %v207
  %v218 = vpop.permute.xlu0 %217
  %221 = vset.pattern.permute.xlu0 0
  %222 = vperm.xlu0 %221, %v208
  %v223 = vpop.permute.xlu0 %222
  %226 = vset.pattern.permute.xlu0 0
  %227 = vperm.xlu0 %226, %v209
  %v228 = vpop.permute.xlu0 %227
  %231 = vset.pattern.permute.xlu0 0
  %232 = vperm.xlu0 %231, %v210
  %v233 = vpop.permute.xlu0 %232
  %236 = vset.pattern.permute.xlu0 0
  %237 = vperm.xlu0 %236, %v211
  %v238 = vpop.permute.xlu0 %237
  %241 = vset.pattern.permute.xlu0 0
  %242 = vperm.xlu0 %241, %v212
  %v243 = vpop.permute.xlu0 %242
  %246 = vset.pattern.permute.xlu0 0
  %247 = vperm.xlu0 %246, %v213
  %v248 = vpop.permute.xlu0 %247
  %251 = vset.pattern.permute.xlu0 0
  %252 = vperm.xlu0 %251, %v214
  %v253 = vpop.permute.xlu0 %252
  %v263 = vunpack.c.l.b16 %v199
  %v264 = vunpack.c.l.b16 %v200
  %v265 = vunpack.c.l.b16 %v201
  %v266 = vunpack.c.l.b16 %v202
  %v267 = vunpack.c.l.b16 %v203
  %v268 = vunpack.c.l.b16 %v204
  %v269 = vunpack.c.l.b16 %v205
  %v270 = vunpack.c.l.b16 %v206
  %v271 = vpack.c.b16 %v264, %v263
  %v272 = vpack.c.b16 %v266, %v265
  %v273 = vpack.c.b16 %v268, %v267
  %v274 = vpack.c.b16 %v270, %v269
  %vm275 = vcmask 523264
  %v277 = vsel %vm275, %v271, 0
  %v280 = vsel %vm275, %v272, 0
  %v283 = vsel %vm275, %v273, 0
  %v286 = vsel %vm275, %v274, 0
  %288 = vmatprep.subr.bf16.mxu0 0
  %289 = vmatpush1.bf16.msra.mxu0 0
  %290 = vmatprep.subr.bf16.mxu0 0
  %291 = vmatpush1.bf16.msra.mxu0 0
  %292 = vmatprep.subr.bf16.mxu0 0
  %293 = vmatpush1.bf16.msra.mxu0 0
  %294 = vmatprep.subr.bf16.mxu0 0
  %295 = vmatpush1.bf16.msra.mxu0 0
  %296 = vmatprep.subr.bf16.mxu0 0
  %297 = vmatpush1.bf16.msra.mxu0 %v198
  %298 = vmatprep.subr.bf16.mxu0 0
  %299 = vmatpush1.bf16.msra.mxu0 %v197
  %300 = vmatprep.subr.bf16.mxu0 0
  %301 = vmatpush1.bf16.msra.mxu0 %v196
  %302 = vmatprep.subr.bf16.mxu0 0
  %303 = vmatpush1.bf16.msra.mxu0 %v195
  %304 = vmatprep.subr.bf16.mxu0 0
  %305 = vmatpush2.bf16.msra.mxu0 0
  %306 = vmatprep.subr.bf16.mxu0 0
  %307 = vmatpush2.bf16.msra.mxu0 0
  %308 = vmatprep.subr.bf16.mxu0 0
  %309 = vmatpush2.bf16.msra.mxu0 0
  %310 = vmatprep.subr.bf16.mxu0 0
  %311 = vmatpush2.bf16.msra.mxu0 0
  %312 = vmatprep.subr.bf16.mxu0 0
  %313 = vmatpush2.bf16.msra.mxu0 0
  %314 = vmatprep.subr.bf16.mxu0 0
  %315 = vmatpush2.bf16.msra.mxu0 0
  %316 = vmatprep.subr.bf16.mxu0 0
  %317 = vmatpush2.bf16.msra.mxu0 0
  %318 = vmatprep.subr.bf16.mxu0 0
  %319 = vmatpush2.bf16.msra.mxu0 0
  %320 = vmatprep.mubr.bf16.mxu0 0
  %321 = vmatmul.mubr.bf16.gmra.mxu0 %v277
  %v322 = vpop.f32.mrf.mxu0
  %v323 = vadd.f32 %v218, %v322
  %v324 = vpop.f32.mrf.mxu0
  %v325 = vpop.f32.mrf.mxu0
  %v326 = vadd.f32 %v223, %v325
  %v327 = vpop.f32.mrf.mxu0
  %328 = vmatprep.mubr.bf16.mxu0 0
  %329 = vmatmul.mubr.bf16.gmra.mxu0 %v280
  %v330 = vpop.f32.mrf.mxu0
  %v331 = vadd.f32 %v228, %v330
  %v332 = vpop.f32.mrf.mxu0
  %v333 = vpop.f32.mrf.mxu0
  %v334 = vadd.f32 %v233, %v333
  %v335 = vpop.f32.mrf.mxu0
  %336 = vmatprep.mubr.bf16.mxu0 0
  %337 = vmatmul.mubr.bf16.gmra.mxu0 %v283
  %v338 = vpop.f32.mrf.mxu0
  %v339 = vadd.f32 %v238, %v338
  %v340 = vpop.f32.mrf.mxu0
  %v341 = vpop.f32.mrf.mxu0
  %v342 = vadd.f32 %v243, %v341
  %v343 = vpop.f32.mrf.mxu0
  %344 = vmatprep.mubr.bf16.mxu0 0
  %345 = vmatmul.mubr.bf16.gmra.mxu0 %v286
  %v346 = vpop.f32.mrf.mxu0
  %v347 = vadd.f32 %v248, %v346
  %v348 = vpop.f32.mrf.mxu0
  %v349 = vpop.f32.mrf.mxu0
  %v350 = vadd.f32 %v253, %v349
  %v351 = vpop.f32.mrf.mxu0
  %352 = vdwg.mxu0
  %v353 = vtanh.pop %v323
  %v354 = vtanh.pop %v326
  %v355 = vtanh.pop %v331
  %v356 = vtanh.pop %v334
  %v357 = vtanh.pop %v339
  %v358 = vtanh.pop %v342
  %v359 = vtanh.pop %v347
  %v360 = vtanh.pop %v350
  %v361 = vpack.c.bf16 %v354, %v353
  %v362 = vpack.c.bf16 %v356, %v355
  %v363 = vpack.c.bf16 %v358, %v357
  %v364 = vpack.c.bf16 %v360, %v359
  %v365 = vld [vmem:[%s5] sm:$0xf]
  %v366 = vld [vmem:[%s5 + $0x4] sm:$0xf]
  %v367 = vld [vmem:[%s6] sm:$0xff]
  %v368 = vld [vmem:[%s6 + $0x8] sm:$0xff]
  %370 = vset.pattern.permute.xlu0 0
  %371 = vperm.xlu0 %370, %v367
  %v372 = vpop.permute.xlu0 %371
  %375 = vset.pattern.permute.xlu0 0
  %376 = vperm.xlu0 %375, %v368
  %v377 = vpop.permute.xlu0 %376
  %v381 = vunpack.c.l.b16 %v365
  %v382 = vunpack.c.l.b16 %v366
  %v383 = vpack.c.b16 %v382, %v381
  %v385 = vsel %vm275, %v383, 0
  %387 = vmatprep.subr.bf16.mxu0 0
  %388 = vmatpush1.bf16.msra.mxu0 0
  %389 = vmatprep.subr.bf16.mxu0 0
  %390 = vmatpush1.bf16.msra.mxu0 0
  %391 = vmatprep.subr.bf16.mxu0 0
  %392 = vmatpush1.bf16.msra.mxu0 0
  %393 = vmatprep.subr.bf16.mxu0 0
  %394 = vmatpush1.bf16.msra.mxu0 0
  %395 = vmatprep.subr.bf16.mxu0 0
  %396 = vmatpush1.bf16.msra.mxu0 %v364
  %397 = vmatprep.subr.bf16.mxu0 0
  %398 = vmatpush1.bf16.msra.mxu0 %v363
  %399 = vmatprep.subr.bf16.mxu0 0
  %400 = vmatpush1.bf16.msra.mxu0 %v362
  %401 = vmatprep.subr.bf16.mxu0 0
  %402 = vmatpush1.bf16.msra.mxu0 %v361
  %403 = vmatprep.subr.bf16.mxu0 0
  %404 = vmatpush2.bf16.msra.mxu0 0
  %405 = vmatprep.subr.bf16.mxu0 0
  %406 = vmatpush2.bf16.msra.mxu0 0
  %407 = vmatprep.subr.bf16.mxu0 0
  %408 = vmatpush2.bf16.msra.mxu0 0
  %409 = vmatprep.subr.bf16.mxu0 0
  %410 = vmatpush2.bf16.msra.mxu0 0
  %411 = vmatprep.subr.bf16.mxu0 0
  %412 = vmatpush2.bf16.msra.mxu0 0
  %413 = vmatprep.subr.bf16.mxu0 0
  %414 = vmatpush2.bf16.msra.mxu0 0
  %415 = vmatprep.subr.bf16.mxu0 0
  %416 = vmatpush2.bf16.msra.mxu0 0
  %417 = vmatprep.subr.bf16.mxu0 0
  %418 = vmatpush2.bf16.msra.mxu0 0
  %419 = vmatprep.mubr.bf16.mxu0 0
  %420 = vmatmul.mubr.bf16.gmra.mxu0 %v385
  %v421 = vpop.f32.mrf.mxu0
  %v422 = vadd.f32 %v372, %v421
  %v423 = vpop.f32.mrf.mxu0
  %v424 = vpop.f32.mrf.mxu0
  %v425 = vadd.f32 %v377, %v424
  %v426 = vpop.f32.mrf.mxu0
  %427 = vdwg.mxu0
  %vm428 = vcmask 64512
  %429 = vst.msk [vmem:[%s7] sm:$0xff] %vm428, %v422
  %430 = vst.msk [vmem:[%s7 + $0x8] sm:$0xff] %vm428, %v425
  // Predicated region
  $region30: #{tpu_custom_call.1} parent=0 // pred_check
    _
  $region31: #{tpu_custom_call.1} parent=0 // pred_check_branch
    %432 = sbr.rel (0) target = $region33
  $region32: #{tpu_custom_call.1} parent=0 // pred_region
    _
  $region33: #{tpu_custom_call.1} parent=0 // pred_fallthru
    _
  // Predicated region
  $region34: #{tpu_custom_call.1} parent=0 // pred_check
    _
  $region35: #{tpu_custom_call.1} parent=0 // pred_check_branch
    %434 = sbr.rel (0) target = $region37
  $region36: #{tpu_custom_call.1} parent=0 // pred_region
    _
  $region37: #{tpu_custom_call.1} parent=0 // pred_fallthru
    _

// kernel: tpu_custom_call.1
$region0: #{tpu_custom_call.1}
  #allocation0 [shape = 'u32[]', space=smem, size = 0x4, offset = 0x4, fixed_abs, tag = 'smem constant byte address 0x4 - core index']
  #allocation1 [shape = 'u32[144,128]{1,0:T(1,128)}', space=vmem, size = 0x12000, scoped, tag = 'internal scratch']
  %s0 = inlined_call_operand.vmem [shape: f32[32,8], index: 0, kind: input, shape index: {}]
  %s1 = inlined_call_operand.vmem [shape: bf16[64,32], index: 1, kind: input, shape index: {}]
  %s2 = inlined_call_operand.vmem [shape: f32[64,1], index: 2, kind: input, shape index: {}]
  %s3 = inlined_call_operand.vmem [shape: bf16[64,64], index: 3, kind: input, shape index: {}]
  %s4 = inlined_call_operand.vmem [shape: f32[64,1], index: 4, kind: input, shape index: {}]
  %s5 = inlined_call_operand.vmem [shape: bf16[16,64], index: 5, kind: input, shape index: {}]
  %s6 = inlined_call_operand.vmem [shape: f32[16,1], index: 6, kind: input, shape index: {}]
  %s7 = inlined_call_operand.vmem [shape: f32[16,8], index: 7, kind: output, shape index: {}]
  %s8 = sld [smem:[#allocation0]]
  $region38: #{tpu_custom_call.1} parent=0
    _
  %s10 = ssub.s32 1, %s8
  %s11 = scalar_select 0, %s10, %s8
  // Predicated region
  $region2: #{tpu_custom_call.1} parent=0 // pred_check
    _
  $region3: #{tpu_custom_call.1} parent=0 // pred_check_branch
    %13 = sbr.rel (0) target = $region5
  $region4: #{tpu_custom_call.1} parent=0 // pred_region
    _
  $region5: #{tpu_custom_call.1} parent=0 // pred_fallthru
    _
  // Predicated region
  $region6: #{tpu_custom_call.1} parent=0 // pred_check
    _
  $region7: #{tpu_custom_call.1} parent=0 // pred_check_branch
    %15 = sbr.rel (0) target = $region9
  $region8: #{tpu_custom_call.1} parent=0 // pred_region
    _
  $region9: #{tpu_custom_call.1} parent=0 // pred_fallthru
    _
  // Predicated region
  $region10: #{tpu_custom_call.1} parent=0 // pred_check
    _
  $region11: #{tpu_custom_call.1} parent=0 // pred_check_branch
    %17 = sbr.rel (0) target = $region13
  $region12: #{tpu_custom_call.1} parent=0 // pred_region
    _
  $region13: #{tpu_custom_call.1} parent=0 // pred_fallthru
    _
  // Predicated region
  $region14: #{tpu_custom_call.1} parent=0 // pred_check
    _
  $region15: #{tpu_custom_call.1} parent=0 // pred_check_branch
    %19 = sbr.rel (0) target = $region17
  $region16: #{tpu_custom_call.1} parent=0 // pred_region
    _
  $region17: #{tpu_custom_call.1} parent=0 // pred_fallthru
    _
  // Predicated region
  $region18: #{tpu_custom_call.1} parent=0 // pred_check
    _
  $region19: #{tpu_custom_call.1} parent=0 // pred_check_branch
    %21 = sbr.rel (0) target = $region21
  $region20: #{tpu_custom_call.1} parent=0 // pred_region
    _
  $region21: #{tpu_custom_call.1} parent=0 // pred_fallthru
    _
  // Predicated region
  $region22: #{tpu_custom_call.1} parent=0 // pred_check
    _
  $region23: #{tpu_custom_call.1} parent=0 // pred_check_branch
    %23 = sbr.rel (0) target = $region25
  $region24: #{tpu_custom_call.1} parent=0 // pred_region
    _
  $region25: #{tpu_custom_call.1} parent=0 // pred_fallthru
    _
  // Predicated region
  $region26: #{tpu_custom_call.1} parent=0 // pred_check
    _
  $region27: #{tpu_custom_call.1} parent=0 // pred_check_branch
    %25 = sbr.rel (0) target = $region29
  $region28: #{tpu_custom_call.1} parent=0 // pred_region
    _
  $region29: #{tpu_custom_call.1} parent=0 // pred_fallthru
    _
  %v27 = vld [vmem:[%s0] sm:$0xff]
  %v28 = vld [vmem:[%s0 + $0x8] sm:$0xff]
  %v29 = vld [vmem:[%s0 + $0x10] sm:$0xff]
  %v30 = vld [vmem:[%s0 + $0x18] sm:$0xff]
  %v31 = vpack.c.bf16 %v28, %v27
  %v32 = vpack.c.bf16 %v30, %v29
  %v33 = vld [vmem:[%s1] sm:$0xf]
  %v34 = vld [vmem:[%s1 + $0x4] sm:$0xf]
  %v35 = vld [vmem:[%s1 + $0x8] sm:$0xf]
  %v36 = vld [vmem:[%s1 + $0xc] sm:$0xf]
  %v37 = vld [vmem:[%s1 + $0x10] sm:$0xf]
  %v38 = vld [vmem:[%s1 + $0x14] sm:$0xf]
  %v39 = vld [vmem:[%s1 + $0x18] sm:$0xf]
  %v40 = vld [vmem:[%s1 + $0x1c] sm:$0xf]
  %v41 = vld [vmem:[%s2] sm:$0xff]
  %v42 = vld [vmem:[%s2 + $0x8] sm:$0xff]
  %v43 = vld [vmem:[%s2 + $0x10] sm:$0xff]
  %v44 = vld [vmem:[%s2 + $0x18] sm:$0xff]
  %v45 = vld [vmem:[%s2 + $0x20] sm:$0xff]
  %v46 = vld [vmem:[%s2 + $0x28] sm:$0xff]
  %v47 = vld [vmem:[%s2 + $0x30] sm:$0xff]
  %v48 = vld [vmem:[%s2 + $0x38] sm:$0xff]
  %50 = vset.pattern.permute.xlu0 0
  %51 = vperm.xlu0 %50, %v41
  %v52 = vpop.permute.xlu0 %51
  %55 = vset.pattern.permute.xlu0 0
  %56 = vperm.xlu0 %55, %v42
  %v57 = vpop.permute.xlu0 %56
  %60 = vset.pattern.permute.xlu0 0
  %61 = vperm.xlu0 %60, %v43
  %v62 = vpop.permute.xlu0 %61
  %65 = vset.pattern.permute.xlu0 0
  %66 = vperm.xlu0 %65, %v44
  %v67 = vpop.permute.xlu0 %66
  %70 = vset.pattern.permute.xlu0 0
  %71 = vperm.xlu0 %70, %v45
  %v72 = vpop.permute.xlu0 %71
  %75 = vset.pattern.permute.xlu0 0
  %76 = vperm.xlu0 %75, %v46
  %v77 = vpop.permute.xlu0 %76
  %80 = vset.pattern.permute.xlu0 0
  %81 = vperm.xlu0 %80, %v47
  %v82 = vpop.permute.xlu0 %81
  %85 = vset.pattern.permute.xlu0 0
  %86 = vperm.xlu0 %85, %v48
  %v87 = vpop.permute.xlu0 %86
  %v97 = vunpack.c.l.b16 %v33
  %v98 = vunpack.c.l.b16 %v34
  %v99 = vunpack.c.l.b16 %v35
  %v100 = vunpack.c.l.b16 %v36
  %v101 = vunpack.c.l.b16 %v37
  %v102 = vunpack.c.l.b16 %v38
  %v103 = vunpack.c.l.b16 %v39
  %v104 = vunpack.c.l.b16 %v40
  %v105 = vpack.c.b16 %v98, %v97
  %v106 = vpack.c.b16 %v100, %v99
  %v107 = vpack.c.b16 %v102, %v101
  %v108 = vpack.c.b16 %v104, %v103
  %vm109 = vcmask 261120
  %v111 = vsel %vm109, %v105, 0
  %v114 = vsel %vm109, %v106, 0
  %v117 = vsel %vm109, %v107, 0
  %v120 = vsel %vm109, %v108, 0
  %122 = vmatprep.subr.bf16.mxu0 0
  %123 = vmatpush1.bf16.msra.mxu0 0
  %124 = vmatprep.subr.bf16.mxu0 0
  %125 = vmatpush1.bf16.msra.mxu0 0
  %126 = vmatprep.subr.bf16.mxu0 0
  %127 = vmatpush1.bf16.msra.mxu0 0
  %128 = vmatprep.subr.bf16.mxu0 0
  %129 = vmatpush1.bf16.msra.mxu0 0
  %130 = vmatprep.subr.bf16.mxu0 0
  %131 = vmatpush1.bf16.msra.mxu0 0
  %132 = vmatprep.subr.bf16.mxu0 0
  %133 = vmatpush1.bf16.msra.mxu0 0
  %134 = vmatprep.subr.bf16.mxu0 0
  %135 = vmatpush1.bf16.msra.mxu0 %v32
  %136 = vmatprep.subr.bf16.mxu0 0
  %137 = vmatpush1.bf16.msra.mxu0 %v31
  %138 = vmatprep.subr.bf16.mxu0 0
  %139 = vmatpush2.bf16.msra.mxu0 0
  %140 = vmatprep.subr.bf16.mxu0 0
  %141 = vmatpush2.bf16.msra.mxu0 0
  %142 = vmatprep.subr.bf16.mxu0 0
  %143 = vmatpush2.bf16.msra.mxu0 0
  %144 = vmatprep.subr.bf16.mxu0 0
  %145 = vmatpush2.bf16.msra.mxu0 0
  %146 = vmatprep.subr.bf16.mxu0 0
  %147 = vmatpush2.bf16.msra.mxu0 0
  %148 = vmatprep.subr.bf16.mxu0 0
  %149 = vmatpush2.bf16.msra.mxu0 0
  %150 = vmatprep.subr.bf16.mxu0 0
  %151 = vmatpush2.bf16.msra.mxu0 0
  %152 = vmatprep.subr.bf16.mxu0 0
  %153 = vmatpush2.bf16.msra.mxu0 0
  %154 = vmatprep.mubr.bf16.mxu0 0
  %155 = vmatmul.mubr.bf16.gmra.mxu0 %v111
  %v156 = vpop.f32.mrf.mxu0
  %v157 = vadd.f32 %v52, %v156
  %v158 = vpop.f32.mrf.mxu0
  %v159 = vpop.f32.mrf.mxu0
  %v160 = vadd.f32 %v57, %v159
  %v161 = vpop.f32.mrf.mxu0
  %162 = vmatprep.mubr.bf16.mxu0 0
  %163 = vmatmul.mubr.bf16.gmra.mxu0 %v114
  %v164 = vpop.f32.mrf.mxu0
  %v165 = vadd.f32 %v62, %v164
  %v166 = vpop.f32.mrf.mxu0
  %v167 = vpop.f32.mrf.mxu0
  %v168 = vadd.f32 %v67, %v167
  %v169 = vpop.f32.mrf.mxu0
  %170 = vmatprep.mubr.bf16.mxu0 0
  %171 = vmatmul.mubr.bf16.gmra.mxu0 %v117
  %v172 = vpop.f32.mrf.mxu0
  %v173 = vadd.f32 %v72, %v172
  %v174 = vpop.f32.mrf.mxu0
  %v175 = vpop.f32.mrf.mxu0
  %v176 = vadd.f32 %v77, %v175
  %v177 = vpop.f32.mrf.mxu0
  %178 = vmatprep.mubr.bf16.mxu0 0
  %179 = vmatmul.mubr.bf16.gmra.mxu0 %v120
  %v180 = vpop.f32.mrf.mxu0
  %v181 = vadd.f32 %v82, %v180
  %v182 = vpop.f32.mrf.mxu0
  %v183 = vpop.f32.mrf.mxu0
  %v184 = vadd.f32 %v87, %v183
  %v185 = vpop.f32.mrf.mxu0
  %186 = vdwg.mxu0
  %v187 = vmax.f32 %v157, 0.0
  %v188 = vmax.f32 %v160, 0.0
  %v189 = vmax.f32 %v165, 0.0
  %v190 = vmax.f32 %v168, 0.0
  %v191 = vmax.f32 %v173, 0.0
  %v192 = vmax.f32 %v176, 0.0
  %v193 = vmax.f32 %v181, 0.0
  %v194 = vmax.f32 %v184, 0.0
  %v195 = vpack.c.bf16 %v188, %v187
  %v196 = vpack.c.bf16 %v190, %v189
  %v197 = vpack.c.bf16 %v192, %v191
  %v198 = vpack.c.bf16 %v194, %v193
  %v199 = vld [vmem:[%s3] sm:$0xf]
  %v200 = vld [vmem:[%s3 + $0x4] sm:$0xf]
  %v201 = vld [vmem:[%s3 + $0x8] sm:$0xf]
  %v202 = vld [vmem:[%s3 + $0xc] sm:$0xf]
  %v203 = vld [vmem:[%s3 + $0x10] sm:$0xf]
  %v204 = vld [vmem:[%s3 + $0x14] sm:$0xf]
  %v205 = vld [vmem:[%s3 + $0x18] sm:$0xf]
  %v206 = vld [vmem:[%s3 + $0x1c] sm:$0xf]
  %v207 = vld [vmem:[%s4] sm:$0xff]
  %v208 = vld [vmem:[%s4 + $0x8] sm:$0xff]
  %v209 = vld [vmem:[%s4 + $0x10] sm:$0xff]
  %v210 = vld [vmem:[%s4 + $0x18] sm:$0xff]
  %v211 = vld [vmem:[%s4 + $0x20] sm:$0xff]
  %v212 = vld [vmem:[%s4 + $0x28] sm:$0xff]
  %v213 = vld [vmem:[%s4 + $0x30] sm:$0xff]
  %v214 = vld [vmem:[%s4 + $0x38] sm:$0xff]
  %216 = vset.pattern.permute.xlu0 0
  %217 = vperm.xlu0 %216, %v207
  %v218 = vpop.permute.xlu0 %217
  %221 = vset.pattern.permute.xlu0 0
  %222 = vperm.xlu0 %221, %v208
  %v223 = vpop.permute.xlu0 %222
  %226 = vset.pattern.permute.xlu0 0
  %227 = vperm.xlu0 %226, %v209
  %v228 = vpop.permute.xlu0 %227
  %231 = vset.pattern.permute.xlu0 0
  %232 = vperm.xlu0 %231, %v210
  %v233 = vpop.permute.xlu0 %232
  %236 = vset.pattern.permute.xlu0 0
  %237 = vperm.xlu0 %236, %v211
  %v238 = vpop.permute.xlu0 %237
  %241 = vset.pattern.permute.xlu0 0
  %242 = vperm.xlu0 %241, %v212
  %v243 = vpop.permute.xlu0 %242
  %246 = vset.pattern.permute.xlu0 0
  %247 = vperm.xlu0 %246, %v213
  %v248 = vpop.permute.xlu0 %247
  %251 = vset.pattern.permute.xlu0 0
  %252 = vperm.xlu0 %251, %v214
  %v253 = vpop.permute.xlu0 %252
  %v263 = vunpack.c.l.b16 %v199
  %v264 = vunpack.c.l.b16 %v200
  %v265 = vunpack.c.l.b16 %v201
  %v266 = vunpack.c.l.b16 %v202
  %v267 = vunpack.c.l.b16 %v203
  %v268 = vunpack.c.l.b16 %v204
  %v269 = vunpack.c.l.b16 %v205
  %v270 = vunpack.c.l.b16 %v206
  %v271 = vpack.c.b16 %v264, %v263
  %v272 = vpack.c.b16 %v266, %v265
  %v273 = vpack.c.b16 %v268, %v267
  %v274 = vpack.c.b16 %v270, %v269
  %vm275 = vcmask 523264
  %v277 = vsel %vm275, %v271, 0
  %v280 = vsel %vm275, %v272, 0
  %v283 = vsel %vm275, %v273, 0
  %v286 = vsel %vm275, %v274, 0
  %288 = vmatprep.subr.bf16.mxu0 0
  %289 = vmatpush1.bf16.msra.mxu0 0
  %290 = vmatprep.subr.bf16.mxu0 0
  %291 = vmatpush1.bf16.msra.mxu0 0
  %292 = vmatprep.subr.bf16.mxu0 0
  %293 = vmatpush1.bf16.msra.mxu0 0
  %294 = vmatprep.subr.bf16.mxu0 0
  %295 = vmatpush1.bf16.msra.mxu0 0
  %296 = vmatprep.subr.bf16.mxu0 0
  %297 = vmatpush1.bf16.msra.mxu0 %v198
  %298 = vmatprep.subr.bf16.mxu0 0
  %299 = vmatpush1.bf16.msra.mxu0 %v197
  %300 = vmatprep.subr.bf16.mxu0 0
  %301 = vmatpush1.bf16.msra.mxu0 %v196
  %302 = vmatprep.subr.bf16.mxu0 0
  %303 = vmatpush1.bf16.msra.mxu0 %v195
  %304 = vmatprep.subr.bf16.mxu0 0
  %305 = vmatpush2.bf16.msra.mxu0 0
  %306 = vmatprep.subr.bf16.mxu0 0
  %307 = vmatpush2.bf16.msra.mxu0 0
  %308 = vmatprep.subr.bf16.mxu0 0
  %309 = vmatpush2.bf16.msra.mxu0 0
  %310 = vmatprep.subr.bf16.mxu0 0
  %311 = vmatpush2.bf16.msra.mxu0 0
  %312 = vmatprep.subr.bf16.mxu0 0
  %313 = vmatpush2.bf16.msra.mxu0 0
  %314 = vmatprep.subr.bf16.mxu0 0
  %315 = vmatpush2.bf16.msra.mxu0 0
  %316 = vmatprep.subr.bf16.mxu0 0
  %317 = vmatpush2.bf16.msra.mxu0 0
  %318 = vmatprep.subr.bf16.mxu0 0
  %319 = vmatpush2.bf16.msra.mxu0 0
  %320 = vmatprep.mubr.bf16.mxu0 0
  %321 = vmatmul.mubr.bf16.gmra.mxu0 %v277
  %v322 = vpop.f32.mrf.mxu0
  %v323 = vadd.f32 %v218, %v322
  %v324 = vpop.f32.mrf.mxu0
  %v325 = vpop.f32.mrf.mxu0
  %v326 = vadd.f32 %v223, %v325
  %v327 = vpop.f32.mrf.mxu0
  %328 = vmatprep.mubr.bf16.mxu0 0
  %329 = vmatmul.mubr.bf16.gmra.mxu0 %v280
  %v330 = vpop.f32.mrf.mxu0
  %v331 = vadd.f32 %v228, %v330
  %v332 = vpop.f32.mrf.mxu0
  %v333 = vpop.f32.mrf.mxu0
  %v334 = vadd.f32 %v233, %v333
  %v335 = vpop.f32.mrf.mxu0
  %336 = vmatprep.mubr.bf16.mxu0 0
  %337 = vmatmul.mubr.bf16.gmra.mxu0 %v283
  %v338 = vpop.f32.mrf.mxu0
  %v339 = vadd.f32 %v238, %v338
  %v340 = vpop.f32.mrf.mxu0
  %v341 = vpop.f32.mrf.mxu0
  %v342 = vadd.f32 %v243, %v341
  %v343 = vpop.f32.mrf.mxu0
  %344 = vmatprep.mubr.bf16.mxu0 0
  %345 = vmatmul.mubr.bf16.gmra.mxu0 %v286
  %v346 = vpop.f32.mrf.mxu0
  %v347 = vadd.f32 %v248, %v346
  %v348 = vpop.f32.mrf.mxu0
  %v349 = vpop.f32.mrf.mxu0
  %v350 = vadd.f32 %v253, %v349
  %v351 = vpop.f32.mrf.mxu0
  %352 = vdwg.mxu0
  %v353 = vtanh.pop %v323
  %v354 = vtanh.pop %v326
  %v355 = vtanh.pop %v331
  %v356 = vtanh.pop %v334
  %v357 = vtanh.pop %v339
  %v358 = vtanh.pop %v342
  %v359 = vtanh.pop %v347
  %v360 = vtanh.pop %v350
  %v361 = vpack.c.bf16 %v354, %v353
  %v362 = vpack.c.bf16 %v356, %v355
  %v363 = vpack.c.bf16 %v358, %v357
  %v364 = vpack.c.bf16 %v360, %v359
  %v365 = vld [vmem:[%s5] sm:$0xf]
  %v366 = vld [vmem:[%s5 + $0x4] sm:$0xf]
  %v367 = vld [vmem:[%s6] sm:$0xff]
  %v368 = vld [vmem:[%s6 + $0x8] sm:$0xff]
  %370 = vset.pattern.permute.xlu0 0
  %371 = vperm.xlu0 %370, %v367
  %v372 = vpop.permute.xlu0 %371
  %375 = vset.pattern.permute.xlu0 0
  %376 = vperm.xlu0 %375, %v368
  %v377 = vpop.permute.xlu0 %376
  %v381 = vunpack.c.l.b16 %v365
  %v382 = vunpack.c.l.b16 %v366
  %v383 = vpack.c.b16 %v382, %v381
  %v385 = vsel %vm275, %v383, 0
  %387 = vmatprep.subr.bf16.mxu0 0
  %388 = vmatpush1.bf16.msra.mxu0 0
  %389 = vmatprep.subr.bf16.mxu0 0
  %390 = vmatpush1.bf16.msra.mxu0 0
  %391 = vmatprep.subr.bf16.mxu0 0
  %392 = vmatpush1.bf16.msra.mxu0 0
  %393 = vmatprep.subr.bf16.mxu0 0
  %394 = vmatpush1.bf16.msra.mxu0 0
  %395 = vmatprep.subr.bf16.mxu0 0
  %396 = vmatpush1.bf16.msra.mxu0 %v364
  %397 = vmatprep.subr.bf16.mxu0 0
  %398 = vmatpush1.bf16.msra.mxu0 %v363
  %399 = vmatprep.subr.bf16.mxu0 0
  %400 = vmatpush1.bf16.msra.mxu0 %v362
  %401 = vmatprep.subr.bf16.mxu0 0
  %402 = vmatpush1.bf16.msra.mxu0 %v361
  %403 = vmatprep.subr.bf16.mxu0 0
  %404 = vmatpush2.bf16.msra.mxu0 0
  %405 = vmatprep.subr.bf16.mxu0 0
  %406 = vmatpush2.bf16.msra.mxu0 0
  %407 = vmatprep.subr.bf16.mxu0 0
  %408 = vmatpush2.bf16.msra.mxu0 0
  %409 = vmatprep.subr.bf16.mxu0 0
  %410 = vmatpush2.bf16.msra.mxu0 0
  %411 = vmatprep.subr.bf16.mxu0 0
  %412 = vmatpush2.bf16.msra.mxu0 0
  %413 = vmatprep.subr.bf16.mxu0 0
  %414 = vmatpush2.bf16.msra.mxu0 0
  %415 = vmatprep.subr.bf16.mxu0 0
  %416 = vmatpush2.bf16.msra.mxu0 0
  %417 = vmatprep.subr.bf16.mxu0 0
  %418 = vmatpush2.bf16.msra.mxu0 0
  %419 = vmatprep.mubr.bf16.mxu0 0
  %420 = vmatmul.mubr.bf16.gmra.mxu0 %v385
  %v421 = vpop.f32.mrf.mxu0
  %v422 = vadd.f32 %v372, %v421
  %v423 = vpop.f32.mrf.mxu0
  %v424 = vpop.f32.mrf.mxu0
  %v425 = vadd.f32 %v377, %v424
  %v426 = vpop.f32.mrf.mxu0
  %427 = vdwg.mxu0
  %vm428 = vcmask 64512
  %429 = vst.msk [vmem:[%s7] sm:$0xff] %vm428, %v422
  %430 = vst.msk [vmem:[%s7 + $0x8] sm:$0xff] %vm428, %v425
  // Predicated region
  $region30: #{tpu_custom_call.1} parent=0 // pred_check
    _
  $region31: #{tpu_custom_call.1} parent=0 // pred_check_branch
    %432 = sbr.rel (0) target = $region33
  $region32: #{tpu_custom_call.1} parent=0 // pred_region
    _
  $region33: #{tpu_custom_call.1} parent=0 // pred_fallthru
    _
  // Predicated region
  $region34: #{tpu_custom_call.1} parent=0 // pred_check
    _
  $region35: #{tpu_custom_call.1} parent=0 // pred_check_branch
    %434 = sbr.rel (0) target = $region37
  $region36: #{tpu_custom_call.1} parent=0 // pred_region
    _
  $region37: #{tpu_custom_call.1} parent=0 // pred_fallthru
    _

</llo_original>
